<compile_context>
chip_gen: v7x
topology: tpu7x:2x2x1
jax: 0.10.0
libtpu: 0.0.40
codegen_flags: <defaults>
</compile_context>

<pallas_src>
import jax
import jax.numpy as jnp
from jax.experimental import pallas as pl
from jax.experimental.pallas import tpu as pltpu

SMOOTH = 1e-6
IGNORE_INDEX = 255
LANE = 128
MAX_TILE_PX = 64 * 1024                 # max pixels DMA'd per grid step
TARGET_BLOCK_BYTES = 2 * 1024 * 1024    # target HBM payload per input block


def _round_down(x, m):
    return (x // m) * m


def _cdiv(a, b):
    return -(-a // b)


def _num_tensorcores():
    """Best-effort TensorCore count (2 on v7x).  Falls back to 1 (safe)."""
    try:
        info = pltpu.get_tpu_info()
        for attr in ("num_cores", "num_tensorcores", "cores_per_chip",
                     "num_cores_per_chip", "core_count"):
            v = getattr(info, attr, None)
            if v:
                return max(1, int(v))
    except Exception:
        pass
    return 1


def _make_semantic_loss_kernel(C, HW, tile_p, chunk, lane, tiles_per_core, unroll):
    n_chunks = tile_p // chunk
    n_folds = chunk // lane

    def fold(x):
        # (rows, chunk) -> (rows, lane) via aligned lane-wide VPU adds (no XLU).
        acc = x[:, 0:lane]
        for f in range(1, n_folds):
            acc = acc + x[:, f * lane:(f + 1) * lane]
        return acc

    def kernel(logits_ref, tgt_ref, inter_ref, psum_ref, tsum_ref, ce_ref):
        n = pl.program_id(1)
        t = pl.program_id(2)

        # Init this core's resident accumulator blocks on its first grid step.
        @pl.when(jnp.logical_and(n == 0, t == 0))
        def _():
            inter_ref[...] = jnp.zeros_like(inter_ref)
            psum_ref[...] = jnp.zeros_like(psum_ref)
            tsum_ref[...] = jnp.zeros_like(tsum_ref)
            ce_ref[...] = jnp.zeros_like(ce_ref)

        # Logical (unclamped) pixel offset of this tile; drives the ragged /
        # out-of-range lane mask so no wrapper-side HBM padding is needed.
        base = (pl.program_id(0) * tiles_per_core + t) * tile_p

        cls_iota = jax.lax.broadcasted_iota(jnp.int32, (C, chunk), 0)
        lane_iota = jax.lax.broadcasted_iota(jnp.int32, (1, chunk), 1)

        def chunk_stats(logits_raw, tgt_raw, off):
            logits = logits_raw.astype(jnp.float32)            # (C, chunk) f32
            tgt = tgt_raw.astype(jnp.int32)                    # (1, chunk)

            valid = (base + off + lane_iota) < HW              # (1, chunk) bool
            tgt_m = jnp.where(valid, tgt, -1)                  # OOB lanes -> no class

            # softmax over the class (sublane) axis; exact reciprocal so the
            # reused CE term (-log softmax[target]) stays exact.
            m = jnp.max(logits, axis=0, keepdims=True)
            ez = jnp.exp(logits - m)
            denom = jnp.sum(ez, axis=0, keepdims=True)
            softmax = ez * pl.reciprocal(denom, approx=False)  # (C, chunk)

            hit = tgt_m == cls_iota                            # (C, chunk) one-hot
            sel = jnp.where(hit, softmax, 0.0)                 # nan-safe on OOB lanes
            psel = jnp.where(valid, softmax, 0.0)

            # Cross-entropy reuses sel: p_t = softmax[target]; ignore_index /
            # out-of-range pixels masked, p_t clamped so log never sees 0.
            p_t = jnp.sum(sel, axis=0, keepdims=True)          # (1, chunk)
            nll = -jnp.log(jnp.maximum(p_t, 1e-37))
            ce_valid = jnp.logical_and(valid, tgt != IGNORE_INDEX)
            ce_px = jnp.where(ce_valid, nll, 0.0)

            return (fold(sel), fold(psel),
                    fold(hit.astype(jnp.float32)), fold(ce_px))

        if n_chunks == 1:
            d_inter, d_psum, d_tsum, d_ce = chunk_stats(
                logits_ref[...], tgt_ref[...], 0)
        else:
            def body(j, carry):
                i_a, p_a, t_a, c_a = carry
                off = pl.multiple_of(j * chunk, chunk)
                d_i, d_p, d_t, d_c = chunk_stats(
                    logits_ref[:, pl.ds(off, chunk)],
                    tgt_ref[:, pl.ds(off, chunk)], off)
                return i_a + d_i, p_a + d_p, t_a + d_t, c_a + d_c

            zc = jnp.zeros((C, lane), jnp.float32)
            z1 = jnp.zeros((1, lane), jnp.float32)
            d_inter, d_psum, d_tsum, d_ce = jax.lax.fori_loop(
                0, n_chunks, body, (zc, zc, zc, z1), unroll=unroll)

        # One read-modify-write of the resident accumulators per grid step.
        inter_ref[...] += d_inter
        psum_ref[...] += d_psum
        tsum_ref[...] += d_tsum
        ce_ref[...] += d_ce

    return kernel


def detr_loss_semantic(pred_masks, target_masks, weight_dict=None):
    """pred_masks: (N, C, H, W) float logits; target_masks: (N, H, W) int labels."""
    weight_dict = weight_dict or {'ce': 1.0, 'mask': 1.0, 'dice': 1.0}
    N, C, H, W = pred_masks.shape
    HW = H * W

    num_cores = _num_tensorcores()

    # Free reshapes only: no HBM pad / transpose / dtype copies in the wrapper.
    logits = pred_masks.reshape(N, C, HW)
    tgt = target_masks.reshape(N, 1, HW)

    # Inner-loop chunk width: lane-aligned, sized to bound vreg pressure.
    if HW < LANE:
        chunk = HW
    else:
        pref = 512 if C <= 8 else (256 if C <= 32 else 128)
        chunk = min(pref, _round_down(HW, LANE))
    lane = min(LANE, chunk)

    # Per-grid-step DMA tile: MiB-scale, multiple of the chunk width, <= HW so
    # only the final tile is ragged (masked in-kernel, never padded in HBM).
    bytes_per_px = C * logits.dtype.itemsize + tgt.dtype.itemsize
    budget_px = max(chunk, TARGET_BLOCK_BYTES // bytes_per_px)
    tile_p = max(chunk, _round_down(min(budget_px, HW, MAX_TILE_PX), chunk))

    n_chunks = tile_p // chunk
    unroll = min(n_chunks, 4 if C <= 8 else 2) if n_chunks > 1 else 1

    tiles_total = _cdiv(HW, tile_p)
    tiles_per_core = _cdiv(tiles_total, num_cores)

    def px_map(c, n, t):
        tile = c * tiles_per_core + t
        if num_cores > 1:   # clamp fully-OOB tiles (their lanes are masked in-kernel)
            tile = jnp.minimum(tile, tiles_total - 1)
        return (n, 0, tile)

    acc_map = lambda c, n, t: (c, 0, 0)

    out_shapes = (
        jax.ShapeDtypeStruct((num_cores, C, lane), jnp.float32),  # intersection
        jax.ShapeDtypeStruct((num_cores, C, lane), jnp.float32),  # softmax sum
        jax.ShapeDtypeStruct((num_cores, C, lane), jnp.float32),  # target count
        jax.ShapeDtypeStruct((num_cores, 1, lane), jnp.float32),  # ce sum
    )

    # VMEM: double-buffered input block + resident accumulators + headroom.
    # Sized against the 64 MiB/TC v7x budget rather than requesting it all.
    block_in_bytes = tile_p * bytes_per_px
    vmem_limit = int(min(48 << 20, max(16 << 20, 3 * block_in_bytes + (2 << 20))))

    if num_cores > 1:
        core_sem = getattr(pltpu, "CORE_PARALLEL", "parallel")
        arb = getattr(pltpu, "ARBITRARY", "arbitrary")
        dim_sems = (core_sem, arb, arb)
    else:
        dim_sems = ("arbitrary", "arbitrary", "arbitrary")

    kernel = _make_semantic_loss_kernel(C, HW, tile_p, chunk, lane,
                                        tiles_per_core, unroll)

    inter, psum, tsum, ce_sum = pl.pallas_call(
        kernel,
        out_shape=out_shapes,
        grid=(num_cores, N, tiles_per_core),
        in_specs=[
            pl.BlockSpec((None, C, tile_p), px_map),
            pl.BlockSpec((None, 1, tile_p), px_map),
        ],
        out_specs=(
            pl.BlockSpec((None, C, lane), acc_map),
            pl.BlockSpec((None, C, lane), acc_map),
            pl.BlockSpec((None, C, lane), acc_map),
            pl.BlockSpec((None, 1, lane), acc_map),
        ),
        compiler_params=pltpu.CompilerParams(
            dimension_semantics=dim_sems,
            vmem_limit_bytes=vmem_limit),
    )(logits, tgt)

    # Tiny final lane / core / class reductions in JAX glue.
    inter = jnp.sum(inter, axis=(0, 2))      # (C,)
    psum = jnp.sum(psum, axis=(0, 2))        # (C,)
    tsum = jnp.sum(tsum, axis=(0, 2))        # (C,)
    ce_total = jnp.sum(ce_sum)

    # CrossEntropyLoss(ignore_index=255), 'mean' over valid pixels.  Valid
    # count = sum(tsum): every non-ignored label is one of the C classes.
    loss_ce = ce_total / jnp.maximum(jnp.sum(tsum), 1.0)

    # DiceLoss: mean over classes actually present in target (torch.unique).
    dice = (2.0 * inter + SMOOTH) / (psum + tsum + SMOOTH)
    present = (tsum > 0).astype(jnp.float32)
    mean_dice = jnp.sum(dice * present) / jnp.maximum(jnp.sum(present), 1.0)
    loss_dice = 1.0 - mean_dice

    return {
        'loss_ce': loss_ce * weight_dict['ce'],
        'loss_dice': loss_dice * weight_dict['dice'],
    }


def _reference_losses(pred_masks, target_masks):
    """Pure-JAX reference matching the PyTorch semantics (no 255s in targets)."""
    N, C, H, W = pred_masks.shape
    logp = jax.nn.log_softmax(pred_masks.astype(jnp.float32), axis=1)
    sm = jax.nn.softmax(pred_masks.astype(jnp.float32), axis=1)
    t = target_masks.astype(jnp.int32)

    # CE
    nll = -jnp.take_along_axis(logp, t[:, None, :, :], axis=1)[:, 0]
    valid = (t != IGNORE_INDEX)
    loss_ce = jnp.sum(nll * valid) / jnp.sum(valid)

    # Dice over unique classes
    dice_scores = []
    for c in range(C):
        if bool(jnp.any(t == c)):
            t_c = (t == c).astype(jnp.float32)
            p_c = sm[:, c]
            inter = jnp.sum(p_c * t_c)
            union = jnp.sum(p_c) + jnp.sum(t_c)
            dice_scores.append((2.0 * inter + SMOOTH) / (union + SMOOTH))
    loss_dice = 1.0 - jnp.mean(jnp.stack(dice_scores))
    return {'loss_ce': loss_ce, 'loss_dice': loss_dice}


if __name__ == "__main__":
    key = jax.random.PRNGKey(0)
    k1, k2 = jax.random.split(key)

    N, C, H, W = 2, 4, 16, 16
    pred_masks = jax.random.normal(k1, (N, C, H, W), dtype=jnp.float32)
    target_masks = jax.random.randint(k2, (N, H, W), 0, C, dtype=jnp.int32)

    losses = detr_loss_semantic(pred_masks, target_masks)
    jax.block_until_ready(losses)

    ref = _reference_losses(pred_masks, target_masks)
    assert abs(float(losses['loss_ce']) - float(ref['loss_ce'])) < 1e-4, (
        losses['loss_ce'], ref['loss_ce'])
    assert abs(float(losses['loss_dice']) - float(ref['loss_dice'])) < 1e-3, (
        losses['loss_dice'], ref['loss_dice'])

    print("KERNEL_OK")
</pallas_src>

<mosaic_0001>
module attributes {stable_mosaic.version = 11 : i64} {
  func.func @kernel(%arg0: i32, %arg1: i32, %arg2: i32, %arg3: memref<1x4x256xf32, #tpu.memory_space<vmem>>, %arg4: memref<1x1x256xi32, #tpu.memory_space<vmem>>, %arg5: memref<1x4x128xf32, #tpu.memory_space<vmem>>, %arg6: memref<1x4x128xf32, #tpu.memory_space<vmem>>, %arg7: memref<1x4x128xf32, #tpu.memory_space<vmem>>, %arg8: memref<1x1x128xf32, #tpu.memory_space<vmem>>) attributes {dimension_semantics = [#tpu.dimension_semantics<arbitrary>, #tpu.dimension_semantics<arbitrary>, #tpu.dimension_semantics<arbitrary>], iteration_bounds = array<i64: 1, 2, 1>, scalar_prefetch = 0 : i64, scratch_operands = 0 : i64, tpu.core_type = #tpu.core_type<tc>, window_params = [{transform_indices = @transform_0, window_bounds = array<i64: 1, 4, 256>}, {transform_indices = @transform_1, window_bounds = array<i64: 1, 1, 256>}, {transform_indices = @transform_2, window_bounds = array<i64: 1, 4, 128>}, {transform_indices = @transform_3, window_bounds = array<i64: 1, 4, 128>}, {transform_indices = @transform_4, window_bounds = array<i64: 1, 4, 128>}, {transform_indices = @transform_5, window_bounds = array<i64: 1, 1, 128>}]} {
    %c0_i32 = arith.constant 0 : i32
    %0 = arith.cmpi eq, %arg1, %c0_i32 : i32
    %c0_i32_0 = arith.constant 0 : i32
    %1 = arith.cmpi eq, %arg2, %c0_i32_0 : i32
    %2 = arith.andi %0, %1 : i1
    %3 = arith.extui %2 : i1 to i32
    %c0_i32_1 = arith.constant 0 : i32
    %4 = arith.cmpi ne, %3, %c0_i32_1 : i32
    scf.if %4 {
      %cst_40 = arith.constant 0.000000e+00 : f32
      %89 = vector.broadcast %cst_40 : f32 to vector<4x128xf32>
      %c0_41 = arith.constant 0 : index
      %c0_42 = arith.constant 0 : index
      %c0_43 = arith.constant 0 : index
      %90 = vector.load %arg5[%c0_41, %c0_42, %c0_43] : memref<1x4x128xf32, #tpu.memory_space<vmem>>, vector<1x4x128xf32>
      %91 = vector.shape_cast %90 : vector<1x4x128xf32> to vector<4x128xf32>
      %92 = vector.shape_cast %89 : vector<4x128xf32> to vector<1x4x128xf32>
      tpu.vector_store %arg5[%c0_41, %c0_42, %c0_43], %92 {strides = array<i32>} : memref<1x4x128xf32, #tpu.memory_space<vmem>>, vector<1x4x128xf32>,
      %cst_44 = arith.constant 0.000000e+00 : f32
      %93 = vector.broadcast %cst_44 : f32 to vector<4x128xf32>
      %c0_45 = arith.constant 0 : index
      %c0_46 = arith.constant 0 : index
      %c0_47 = arith.constant 0 : index
      %94 = vector.load %arg6[%c0_45, %c0_46, %c0_47] : memref<1x4x128xf32, #tpu.memory_space<vmem>>, vector<1x4x128xf32>
      %95 = vector.shape_cast %94 : vector<1x4x128xf32> to vector<4x128xf32>
      %96 = vector.shape_cast %93 : vector<4x128xf32> to vector<1x4x128xf32>
      tpu.vector_store %arg6[%c0_45, %c0_46, %c0_47], %96 {strides = array<i32>} : memref<1x4x128xf32, #tpu.memory_space<vmem>>, vector<1x4x128xf32>,
      %cst_48 = arith.constant 0.000000e+00 : f32
      %97 = vector.broadcast %cst_48 : f32 to vector<4x128xf32>
      %c0_49 = arith.constant 0 : index
      %c0_50 = arith.constant 0 : index
      %c0_51 = arith.constant 0 : index
      %98 = vector.load %arg7[%c0_49, %c0_50, %c0_51] : memref<1x4x128xf32, #tpu.memory_space<vmem>>, vector<1x4x128xf32>
      %99 = vector.shape_cast %98 : vector<1x4x128xf32> to vector<4x128xf32>
      %100 = vector.shape_cast %97 : vector<4x128xf32> to vector<1x4x128xf32>
      tpu.vector_store %arg7[%c0_49, %c0_50, %c0_51], %100 {strides = array<i32>} : memref<1x4x128xf32, #tpu.memory_space<vmem>>, vector<1x4x128xf32>,
      %cst_52 = arith.constant 0.000000e+00 : f32
      %101 = vector.broadcast %cst_52 : f32 to vector<1x128xf32>
      %c0_53 = arith.constant 0 : index
      %c0_54 = arith.constant 0 : index
      %c0_55 = arith.constant 0 : index
      %102 = vector.load %arg8[%c0_53, %c0_54, %c0_55] : memref<1x1x128xf32, #tpu.memory_space<vmem>>, vector<1x1x128xf32>
      %103 = vector.shape_cast %102 : vector<1x1x128xf32> to vector<1x128xf32>
      %104 = vector.shape_cast %101 : vector<1x128xf32> to vector<1x1x128xf32>
      tpu.vector_store %arg8[%c0_53, %c0_54, %c0_55], %104 {strides = array<i32>} : memref<1x1x128xf32, #tpu.memory_space<vmem>>, vector<1x1x128xf32>,
    } else {
    }
    %c1_i32 = arith.constant 1 : i32
    %5 = arith.muli %arg0, %c1_i32 : i32
    %6 = arith.addi %5, %arg2 : i32
    %c256_i32 = arith.constant 256 : i32
    %7 = arith.muli %6, %c256_i32 : i32
    %8 = tpu.iota {dimensions = array<i32: 0>} : vector<4x256xi32>
    %9 = tpu.iota {dimensions = array<i32: 1>} : vector<1x256xi32>
    %c0 = arith.constant 0 : index
    %c0_2 = arith.constant 0 : index
    %c0_3 = arith.constant 0 : index
    %10 = vector.load %arg3[%c0, %c0_2, %c0_3] : memref<1x4x256xf32, #tpu.memory_space<vmem>>, vector<1x4x256xf32>
    %11 = vector.shape_cast %10 : vector<1x4x256xf32> to vector<4x256xf32>
    %c0_4 = arith.constant 0 : index
    %c0_5 = arith.constant 0 : index
    %c0_6 = arith.constant 0 : index
    %12 = vector.load %arg4[%c0_4, %c0_5, %c0_6] : memref<1x1x256xi32, #tpu.memory_space<vmem>>, vector<1x1x256xi32>
    %13 = vector.shape_cast %12 : vector<1x1x256xi32> to vector<1x256xi32>
    %c0_i32_7 = arith.constant 0 : i32
    %14 = arith.addi %7, %c0_i32_7 : i32
    %15 = vector.broadcast %14 : i32 to vector<1x256xi32>
    %16 = arith.addi %15, %9 : vector<1x256xi32>
    %c256_i32_8 = arith.constant 256 : i32
    %17 = vector.broadcast %c256_i32_8 : i32 to vector<1x256xi32>
    %18 = arith.cmpi slt, %16, %17 : vector<1x256xi32>
    %c-1_i32 = arith.constant -1 : i32
    %19 = vector.broadcast %c-1_i32 : i32 to vector<1x256xi32>
    %20 = arith.select %18, %13, %19 : vector<1x256xi1>, vector<1x256xi32>
    %cst = arith.constant dense<0xFF800000> : vector<256xf32>
    %21 = vector.multi_reduction <maximumf>, %11, %cst [0] : vector<4x256xf32> to vector<256xf32>
    %22 = vector.shape_cast %21 : vector<256xf32> to vector<1x256xf32>
    %23 = vector.broadcast %22 : vector<1x256xf32> to vector<4x256xf32>
    %24 = arith.subf %11, %23 : vector<4x256xf32>
    %25 = math.exp %24 : vector<4x256xf32>
    %cst_9 = arith.constant dense<0.000000e+00> : vector<256xf32>
    %26 = vector.multi_reduction <add>, %25, %cst_9 [0] : vector<4x256xf32> to vector<256xf32>
    %27 = vector.shape_cast %26 : vector<256xf32> to vector<1x256xf32>
    %28 = tpu.reciprocal %27 : vector<1x256xf32> -> vector<1x256xf32>
    %29 = vector.broadcast %28 : vector<1x256xf32> to vector<4x256xf32>
    %30 = arith.mulf %25, %29 : vector<4x256xf32>
    %31 = vector.broadcast %20 : vector<1x256xi32> to vector<4x256xi32>
    %32 = arith.cmpi eq, %31, %8 : vector<4x256xi32>
    %cst_10 = arith.constant 0.000000e+00 : f32
    %33 = vector.broadcast %cst_10 : f32 to vector<4x256xf32>
    %34 = arith.select %32, %30, %33 : vector<4x256xi1>, vector<4x256xf32>
    %cst_11 = arith.constant 0.000000e+00 : f32
    %35 = vector.shape_cast %18 : vector<1x256xi1> to vector<1x256xi1>
    %36 = vector.broadcast %35 : vector<1x256xi1> to vector<4x256xi1>
    %37 = vector.broadcast %cst_11 : f32 to vector<4x256xf32>
    %38 = arith.select %36, %30, %37 : vector<4x256xi1>, vector<4x256xf32>
    %cst_12 = arith.constant dense<0.000000e+00> : vector<256xf32>
    %39 = vector.multi_reduction <add>, %34, %cst_12 [0] : vector<4x256xf32> to vector<256xf32>
    %40 = vector.shape_cast %39 : vector<256xf32> to vector<1x256xf32>
    %cst_13 = arith.constant 9.99999991E-38 : f32
    %41 = vector.broadcast %cst_13 : f32 to vector<1x256xf32>
    %42 = arith.maximumf %40, %41 : vector<1x256xf32>
    %43 = math.log %42 : vector<1x256xf32>
    %cst_14 = arith.constant 0.000000e+00 : f32
    %44 = vector.broadcast %cst_14 : f32 to vector<1x256xf32>
    %45 = arith.subf %44, %43 : vector<1x256xf32>
    %c255_i32 = arith.constant 255 : i32
    %46 = vector.broadcast %c255_i32 : i32 to vector<1x256xi32>
    %47 = arith.cmpi ne, %13, %46 : vector<1x256xi32>
    %48 = arith.andi %18, %47 : vector<1x256xi1>
    %cst_15 = arith.constant 0.000000e+00 : f32
    %49 = vector.broadcast %cst_15 : f32 to vector<1x256xf32>
    %50 = arith.select %48, %45, %49 : vector<1x256xi1>, vector<1x256xf32>
    %51 = vector.extract_strided_slice %34 {offsets = [0, 0], sizes = [4, 128], strides = [1, 1]} : vector<4x256xf32> to vector<4x128xf32>
    %52 = vector.extract_strided_slice %34 {offsets = [0, 128], sizes = [4, 128], strides = [1, 1]} : vector<4x256xf32> to vector<4x128xf32>
    %53 = arith.addf %51, %52 : vector<4x128xf32>
    %54 = vector.extract_strided_slice %38 {offsets = [0, 0], sizes = [4, 128], strides = [1, 1]} : vector<4x256xf32> to vector<4x128xf32>
    %55 = vector.extract_strided_slice %38 {offsets = [0, 128], sizes = [4, 128], strides = [1, 1]} : vector<4x256xf32> to vector<4x128xf32>
    %56 = arith.addf %54, %55 : vector<4x128xf32>
    %57 = arith.extui %32 : vector<4x256xi1> to vector<4x256xi32>
    %58 = arith.sitofp %57 : vector<4x256xi32> to vector<4x256xf32>
    %59 = vector.extract_strided_slice %58 {offsets = [0, 0], sizes = [4, 128], strides = [1, 1]} : vector<4x256xf32> to vector<4x128xf32>
    %60 = vector.extract_strided_slice %58 {offsets = [0, 128], sizes = [4, 128], strides = [1, 1]} : vector<4x256xf32> to vector<4x128xf32>
    %61 = arith.addf %59, %60 : vector<4x128xf32>
    %62 = vector.extract_strided_slice %50 {offsets = [0, 0], sizes = [1, 128], strides = [1, 1]} : vector<1x256xf32> to vector<1x128xf32>
    %63 = vector.extract_strided_slice %50 {offsets = [0, 128], sizes = [1, 128], strides = [1, 1]} : vector<1x256xf32> to vector<1x128xf32>
    %64 = arith.addf %62, %63 : vector<1x128xf32>
    %c0_16 = arith.constant 0 : index
    %c0_17 = arith.constant 0 : index
    %c0_18 = arith.constant 0 : index
    %65 = vector.load %arg5[%c0_16, %c0_17, %c0_18] : memref<1x4x128xf32, #tpu.memory_space<vmem>>, vector<1x4x128xf32>
    %66 = vector.shape_cast %65 : vector<1x4x128xf32> to vector<4x128xf32>
    %67 = arith.addf %66, %53 : vector<4x128xf32>
    %c0_19 = arith.constant 0 : index
    %c0_20 = arith.constant 0 : index
    %c0_21 = arith.constant 0 : index
    %68 = vector.load %arg5[%c0_19, %c0_20, %c0_21] : memref<1x4x128xf32, #tpu.memory_space<vmem>>, vector<1x4x128xf32>
    %69 = vector.shape_cast %68 : vector<1x4x128xf32> to vector<4x128xf32>
    %70 = vector.shape_cast %67 : vector<4x128xf32> to vector<1x4x128xf32>
    tpu.vector_store %arg5[%c0_19, %c0_20, %c0_21], %70 {strides = array<i32>} : memref<1x4x128xf32, #tpu.memory_space<vmem>>, vector<1x4x128xf32>,
    %c0_22 = arith.constant 0 : index
    %c0_23 = arith.constant 0 : index
    %c0_24 = arith.constant 0 : index
    %71 = vector.load %arg6[%c0_22, %c0_23, %c0_24] : memref<1x4x128xf32, #tpu.memory_space<vmem>>, vector<1x4x128xf32>
    %72 = vector.shape_cast %71 : vector<1x4x128xf32> to vector<4x128xf32>
    %73 = arith.addf %72, %56 : vector<4x128xf32>
    %c0_25 = arith.constant 0 : index
    %c0_26 = arith.constant 0 : index
    %c0_27 = arith.constant 0 : index
    %74 = vector.load %arg6[%c0_25, %c0_26, %c0_27] : memref<1x4x128xf32, #tpu.memory_space<vmem>>, vector<1x4x128xf32>
    %75 = vector.shape_cast %74 : vector<1x4x128xf32> to vector<4x128xf32>
    %76 = vector.shape_cast %73 : vector<4x128xf32> to vector<1x4x128xf32>
    tpu.vector_store %arg6[%c0_25, %c0_26, %c0_27], %76 {strides = array<i32>} : memref<1x4x128xf32, #tpu.memory_space<vmem>>, vector<1x4x128xf32>,
    %c0_28 = arith.constant 0 : index
    %c0_29 = arith.constant 0 : index
    %c0_30 = arith.constant 0 : index
    %77 = vector.load %arg7[%c0_28, %c0_29, %c0_30] : memref<1x4x128xf32, #tpu.memory_space<vmem>>, vector<1x4x128xf32>
    %78 = vector.shape_cast %77 : vector<1x4x128xf32> to vector<4x128xf32>
    %79 = arith.addf %78, %61 : vector<4x128xf32>
    %c0_31 = arith.constant 0 : index
    %c0_32 = arith.constant 0 : index
    %c0_33 = arith.constant 0 : index
    %80 = vector.load %arg7[%c0_31, %c0_32, %c0_33] : memref<1x4x128xf32, #tpu.memory_space<vmem>>, vector<1x4x128xf32>
    %81 = vector.shape_cast %80 : vector<1x4x128xf32> to vector<4x128xf32>
    %82 = vector.shape_cast %79 : vector<4x128xf32> to vector<1x4x128xf32>
    tpu.vector_store %arg7[%c0_31, %c0_32, %c0_33], %82 {strides = array<i32>} : memref<1x4x128xf32, #tpu.memory_space<vmem>>, vector<1x4x128xf32>,
    %c0_34 = arith.constant 0 : index
    %c0_35 = arith.constant 0 : index
    %c0_36 = arith.constant 0 : index
    %83 = vector.load %arg8[%c0_34, %c0_35, %c0_36] : memref<1x1x128xf32, #tpu.memory_space<vmem>>, vector<1x1x128xf32>
    %84 = vector.shape_cast %83 : vector<1x1x128xf32> to vector<1x128xf32>
    %85 = arith.addf %84, %64 : vector<1x128xf32>
    %c0_37 = arith.constant 0 : index
    %c0_38 = arith.constant 0 : index
    %c0_39 = arith.constant 0 : index
    %86 = vector.load %arg8[%c0_37, %c0_38, %c0_39] : memref<1x1x128xf32, #tpu.memory_space<vmem>>, vector<1x1x128xf32>
    %87 = vector.shape_cast %86 : vector<1x1x128xf32> to vector<1x128xf32>
    %88 = vector.shape_cast %85 : vector<1x128xf32> to vector<1x1x128xf32>
    tpu.vector_store %arg8[%c0_37, %c0_38, %c0_39], %88 {strides = array<i32>} : memref<1x1x128xf32, #tpu.memory_space<vmem>>, vector<1x1x128xf32>,
    return
  }
  func.func @transform_0(%arg0: i32, %arg1: i32, %arg2: i32) -> (i32, i32, i32) {
    %c1_i32 = arith.constant 1 : i32
    %0 = arith.muli %arg0, %c1_i32 : i32
    %1 = arith.addi %0, %arg2 : i32
    %c0_i32 = arith.constant 0 : i32
    %c0_i32_0 = arith.constant 0 : i32
    return %arg1, %c0_i32, %1 : i32, i32, i32
  }
  func.func @transform_1(%arg0: i32, %arg1: i32, %arg2: i32) -> (i32, i32, i32) {
    %c1_i32 = arith.constant 1 : i32
    %0 = arith.muli %arg0, %c1_i32 : i32
    %1 = arith.addi %0, %arg2 : i32
    %c0_i32 = arith.constant 0 : i32
    %c0_i32_0 = arith.constant 0 : i32
    return %arg1, %c0_i32, %1 : i32, i32, i32
  }
  func.func @transform_2(%arg0: i32, %arg1: i32, %arg2: i32) -> (i32, i32, i32) {
    %c0_i32 = arith.constant 0 : i32
    %c0_i32_0 = arith.constant 0 : i32
    %c0_i32_1 = arith.constant 0 : i32
    return %arg0, %c0_i32, %c0_i32_0 : i32, i32, i32
  }
  func.func @transform_3(%arg0: i32, %arg1: i32, %arg2: i32) -> (i32, i32, i32) {
    %c0_i32 = arith.constant 0 : i32
    %c0_i32_0 = arith.constant 0 : i32
    %c0_i32_1 = arith.constant 0 : i32
    return %arg0, %c0_i32, %c0_i32_0 : i32, i32, i32
  }
  func.func @transform_4(%arg0: i32, %arg1: i32, %arg2: i32) -> (i32, i32, i32) {
    %c0_i32 = arith.constant 0 : i32
    %c0_i32_0 = arith.constant 0 : i32
    %c0_i32_1 = arith.constant 0 : i32
    return %arg0, %c0_i32, %c0_i32_0 : i32, i32, i32
  }
  func.func @transform_5(%arg0: i32, %arg1: i32, %arg2: i32) -> (i32, i32, i32) {
    %c0_i32 = arith.constant 0 : i32
    %c0_i32_0 = arith.constant 0 : i32
    %c0_i32_1 = arith.constant 0 : i32
    return %arg0, %c0_i32, %c0_i32_0 : i32, i32, i32
  }
}

</mosaic_0001>

<llo_original>
// kernel: tpu_custom_call.1
$region0: #{tpu_custom_call.1}
  #allocation0 [shape = 'u32[]', space=smem, size = 0x4, offset = 0x4, fixed_abs, tag = 'smem constant byte address 0x4 - core index']
  #allocation1 [shape = 'u32[144,128]{1,0:T(1,128)}', space=vmem, size = 0x12000, scoped, tag = 'internal scratch']
  %s0 = inlined_call_operand.hbm [shape: f32[2,4,256], index: 0, kind: input, shape index: {}]
  %s1 = inlined_call_operand.hbm [shape: s32[2,1,256], index: 1, kind: input, shape index: {}]
  %s2 = inlined_call_operand.hbm [shape: f32[1,4,128], index: 2, kind: output, shape index: {0}]
  %s3 = inlined_call_operand.hbm [shape: f32[1,4,128], index: 3, kind: output, shape index: {1}]
  %s4 = inlined_call_operand.hbm [shape: f32[1,4,128], index: 4, kind: output, shape index: {2}]
  %s5 = inlined_call_operand.hbm [shape: f32[1,1,128], index: 5, kind: output, shape index: {3}]
  %6 = xla_tuple %s2, %s3, %s4, %s5
  %s7 = sld [smem:[#allocation0]]
  $region77: #{tpu_custom_call.1} parent=0
    _
  %s9 = ssub.s32 1, %s7
  %s10 = scalar_select 0, %s9, %s7
  $region1: #{tpu_custom_call.1} parent=0
    #allocation2 [shape = 'u8[8192]{0}', space=vmem, size = 0x2000, scoped, tag = 'input window, operand 0']
    #allocation3 [shape = 's32[2]{0}', space=sflag, size = 0x8, scoped, tag = 'scoped memory for tpu_custom_call.1']
    #allocation4 [shape = 's32[2]{0}', space=sflag, size = 0x8, scoped, tag = 'scoped memory for tpu_custom_call.1']
    #allocation5 [shape = 'u8[2048]{0}', space=vmem, size = 0x800, scoped, tag = 'input window, operand 1']
    #allocation6 [shape = 's32[2]{0}', space=sflag, size = 0x8, scoped, tag = 'scoped memory for tpu_custom_call.1']
    #allocation7 [shape = 'u8[2048]{0}', space=vmem, size = 0x800, scoped, tag = 'output window, operand 0, single buffered']
    #allocation8 [shape = 'u8[2048]{0}', space=vmem, size = 0x800, scoped, tag = 'output window, operand 1, single buffered']
    #allocation9 [shape = 's32[1]{0}', space=sflag, size = 0x4, scoped, tag = 'scoped memory for tpu_custom_call.1']
    #allocation10 [shape = 'u8[2048]{0}', space=vmem, size = 0x800, scoped, tag = 'output window, operand 2, single buffered']
    #allocation11 [shape = 'u8[512]{0}', space=vmem, size = 0x400, scoped, tag = 'output window, operand 3, single buffered']
    #allocation12 [shape = 's32[1]{0}', space=sflag, size = 0x4, scoped, tag = 'scoped memory for tpu_custom_call.1']
    %11 = vsyncpa [#allocation3], 0
    %s12 = scalar_lea.sflag [#allocation3], 1
    %13 = vsyncpa %s12, 0
    %14 = vsyncpa [#allocation6], 0
    %s15 = scalar_lea.sflag [#allocation6], 1
    %16 = vsyncpa %s15, 0
    %17 = vsyncpa [#allocation4], 0
    %18 = vsyncpa [#allocation9], 0
    %19 = vsyncpa [#allocation12], 0
    loop: start=0, step=1, limit=4
    $region2: #{tpu_custom_call.1} parent=1 // loop_pre_header
      _
    $region3: #{tpu_custom_call.1} parent=1 // loop_header
      %s21 = sphi 0, %s25
      %p22 = scmp.ge.s32.totalorder %s21, 4
      %s28 = sphi 0, %s47
      %s29 = sphi 0, %s43
      %s30 = sphi 0, %s39
      %s31 = sphi 0, %s28
      %s32 = sphi 0, %s29
      %s33 = sphi 0, %s30
      %s34 = sphi 0, %s31
      %s35 = sphi 0, %s32
      %s36 = sphi 0, %s33
      %s54 = sphi 0, %s56
      %s57 = sphi 0, %s54
      %s58 = sphi 0, %s57
      %s74 = sphi 0, %s58
      %s84 = sphi 0, %s86
      %s87 = sphi 0, %s84
      %s88 = sphi 0, %s87
      %s104 = sphi 0, %s88
      %s110 = sphi 0, %s112
      %s113 = sphi 0, %s110
      %s114 = sphi 0, %s113
      %s130 = sphi 0, %s114
      %s136 = sphi 0, %s138
      %s139 = sphi 0, %s136
      %s140 = sphi 0, %s139
      %s156 = sphi 0, %s140
      %s162 = sphi 0, %s164
      %s165 = sphi 0, %s162
      %s166 = sphi 0, %s165
      %s182 = sphi 0, %s166
      %s188 = sphi 0, %s190
      %s191 = sphi 0, %s188
      %s192 = sphi 0, %s191
      %s208 = sphi 0, %s192
    $region4: #{tpu_custom_call.1} parent=1 // loop_header_branch
      %24 = sbr.rel (%p22) target = $region8
    $region5: #{tpu_custom_call.1} parent=1 // loop_body
      %s26 = ssub.s32 %s21, 1
      %s27 = ssub.s32 %s21, 2
      %s37 = sadd.s32 1, %s30
      %p38 = scmp.ge.s32.totalorder %s37, 1
      %s39 = scalar_select %p38, 0, %s37
      %s40 = sadd.s32 1, %s29
      %s41 = scalar_select %p38, %s40, %s29
      %p42 = scmp.ge.s32.totalorder %s41, 2
      %s43 = scalar_select %p42, 0, %s41
      %s44 = sadd.s32 1, %s28
      %s45 = scalar_select %p42, %s44, %s28
      %p46 = scmp.ge.s32.totalorder %s45, 1
      %s47 = scalar_select %p46, 0, %s45
      %s48 = sadd.s32 %s28, %s30
      %s49 = sadd.s32 %s47, %s39
      %s50 = ssub.s32 %s29, %s43
      %s51 = ssub.s32 %s48, %s49
      %s52 = sor.u32 %s50, %s51
      %p53 = scmp.eq.s32.totalorder %s52, 0
      %s55 = sadd.s32 %s54, 1
      %s56 = scalar_select %p53, %s54, %s55
      %p59 = pneg %p53
      %p60 = scmp.eq.s32.totalorder %s21, 1
      %p61 = por %p59, %p60
      %p62 = scmp.ne.s32.totalorder %s54, %s57
      %p63 = scmp.eq.s32.totalorder %s21, 0
      %p64 = por %p62, %p63
      %p65 = scmp.ne.s32.totalorder %s54, %s57
      %p66 = scmp.eq.s32.totalorder %s26, 1
      %p67 = por %p65, %p66
      %p68 = scmp.ne.s32.totalorder %s57, %s58
      %p69 = scmp.eq.s32.totalorder %s26, 0
      %p70 = por %p68, %p69
      %p71 = scmp.ne.s32.totalorder %s57, %s58
      %p72 = scmp.eq.s32.totalorder %s27, 1
      %p73 = por %p71, %p72
      %p75 = scmp.ne.s32.totalorder %s58, %s74
      %p76 = scmp.eq.s32.totalorder %s27, 0
      %p77 = por %p75, %p76
      %s78 = sadd.s32 %s28, %s30
      %s79 = sadd.s32 %s47, %s39
      %s80 = ssub.s32 %s29, %s43
      %s81 = ssub.s32 %s78, %s79
      %s82 = sor.u32 %s80, %s81
      %p83 = scmp.eq.s32.totalorder %s82, 0
      %s85 = sadd.s32 %s84, 1
      %s86 = scalar_select %p83, %s84, %s85
      %p89 = pneg %p83
      %p90 = scmp.eq.s32.totalorder %s21, 1
      %p91 = por %p89, %p90
      %p92 = scmp.ne.s32.totalorder %s84, %s87
      %p93 = scmp.eq.s32.totalorder %s21, 0
      %p94 = por %p92, %p93
      %p95 = scmp.ne.s32.totalorder %s84, %s87
      %p96 = scmp.eq.s32.totalorder %s26, 1
      %p97 = por %p95, %p96
      %p98 = scmp.ne.s32.totalorder %s87, %s88
      %p99 = scmp.eq.s32.totalorder %s26, 0
      %p100 = por %p98, %p99
      %p101 = scmp.ne.s32.totalorder %s87, %s88
      %p102 = scmp.eq.s32.totalorder %s27, 1
      %p103 = por %p101, %p102
      %p105 = scmp.ne.s32.totalorder %s88, %s104
      %p106 = scmp.eq.s32.totalorder %s27, 0
      %p107 = por %p105, %p106
      %s108 = ssub.s32 %s28, %s47
      %p109 = scmp.eq.s32.totalorder %s108, 0
      %s111 = sadd.s32 %s110, 1
      %s112 = scalar_select %p109, %s110, %s111
      %p115 = pneg %p109
      %p116 = scmp.eq.s32.totalorder %s21, 1
      %p117 = por %p115, %p116
      %p118 = scmp.ne.s32.totalorder %s110, %s113
      %p119 = scmp.eq.s32.totalorder %s21, 0
      %p120 = por %p118, %p119
      %p121 = scmp.ne.s32.totalorder %s110, %s113
      %p122 = scmp.eq.s32.totalorder %s26, 1
      %p123 = por %p121, %p122
      %p124 = scmp.ne.s32.totalorder %s113, %s114
      %p125 = scmp.eq.s32.totalorder %s26, 0
      %p126 = por %p124, %p125
      %p127 = scmp.ne.s32.totalorder %s113, %s114
      %p128 = scmp.eq.s32.totalorder %s27, 1
      %p129 = por %p127, %p128
      %p131 = scmp.ne.s32.totalorder %s114, %s130
      %p132 = scmp.eq.s32.totalorder %s27, 0
      %p133 = por %p131, %p132
      %s134 = ssub.s32 %s28, %s47
      %p135 = scmp.eq.s32.totalorder %s134, 0
      %s137 = sadd.s32 %s136, 1
      %s138 = scalar_select %p135, %s136, %s137
      %p141 = pneg %p135
      %p142 = scmp.eq.s32.totalorder %s21, 1
      %p143 = por %p141, %p142
      %p144 = scmp.ne.s32.totalorder %s136, %s139
      %p145 = scmp.eq.s32.totalorder %s21, 0
      %p146 = por %p144, %p145
      %p147 = scmp.ne.s32.totalorder %s136, %s139
      %p148 = scmp.eq.s32.totalorder %s26, 1
      %p149 = por %p147, %p148
      %p150 = scmp.ne.s32.totalorder %s139, %s140
      %p151 = scmp.eq.s32.totalorder %s26, 0
      %p152 = por %p150, %p151
      %p153 = scmp.ne.s32.totalorder %s139, %s140
      %p154 = scmp.eq.s32.totalorder %s27, 1
      %p155 = por %p153, %p154
      %p157 = scmp.ne.s32.totalorder %s140, %s156
      %p158 = scmp.eq.s32.totalorder %s27, 0
      %p159 = por %p157, %p158
      %s160 = ssub.s32 %s28, %s47
      %p161 = scmp.eq.s32.totalorder %s160, 0
      %s163 = sadd.s32 %s162, 1
      %s164 = scalar_select %p161, %s162, %s163
      %p167 = pneg %p161
      %p168 = scmp.eq.s32.totalorder %s21, 1
      %p169 = por %p167, %p168
      %p170 = scmp.ne.s32.totalorder %s162, %s165
      %p171 = scmp.eq.s32.totalorder %s21, 0
      %p172 = por %p170, %p171
      %p173 = scmp.ne.s32.totalorder %s162, %s165
      %p174 = scmp.eq.s32.totalorder %s26, 1
      %p175 = por %p173, %p174
      %p176 = scmp.ne.s32.totalorder %s165, %s166
      %p177 = scmp.eq.s32.totalorder %s26, 0
      %p178 = por %p176, %p177
      %p179 = scmp.ne.s32.totalorder %s165, %s166
      %p180 = scmp.eq.s32.totalorder %s27, 1
      %p181 = por %p179, %p180
      %p183 = scmp.ne.s32.totalorder %s166, %s182
      %p184 = scmp.eq.s32.totalorder %s27, 0
      %p185 = por %p183, %p184
      %s186 = ssub.s32 %s28, %s47
      %p187 = scmp.eq.s32.totalorder %s186, 0
      %s189 = sadd.s32 %s188, 1
      %s190 = scalar_select %p187, %s188, %s189
      %p193 = pneg %p187
      %p194 = scmp.eq.s32.totalorder %s21, 1
      %p195 = por %p193, %p194
      %p196 = scmp.ne.s32.totalorder %s188, %s191
      %p197 = scmp.eq.s32.totalorder %s21, 0
      %p198 = por %p196, %p197
      %p199 = scmp.ne.s32.totalorder %s188, %s191
      %p200 = scmp.eq.s32.totalorder %s26, 1
      %p201 = por %p199, %p200
      %p202 = scmp.ne.s32.totalorder %s191, %s192
      %p203 = scmp.eq.s32.totalorder %s26, 0
      %p204 = por %p202, %p203
      %p205 = scmp.ne.s32.totalorder %s191, %s192
      %p206 = scmp.eq.s32.totalorder %s27, 1
      %p207 = por %p205, %p206
      %p209 = scmp.ne.s32.totalorder %s192, %s208
      %p210 = scmp.eq.s32.totalorder %s27, 0
      %p211 = por %p209, %p210
      %p212 = scmp.le.s32.totalorder 1, %s21
      %p213 = scmp.lt.s32.totalorder %s21, 3
      %p214 = pnand %p212, %p213
      %p215 = pneg %p214
      // Predicated region
      $region9: #{tpu_custom_call.1} parent=5 // pred_check
        _
      $region10: #{tpu_custom_call.1} parent=5 // pred_check_branch
        %217 = sbr.rel (%p214) target = $region12
      $region11: #{tpu_custom_call.1} parent=5 // pred_region
        %s218 = ssub.s32 %s21, 1
      $region12: #{tpu_custom_call.1} parent=5 // pred_fallthru
        _
      %p219 = scmp.lt.s32.totalorder %s21, 2
      // Predicated region
      $region13: #{tpu_custom_call.1} parent=5 // pred_check
        %p220 = pneg %p219
      $region14: #{tpu_custom_call.1} parent=5 // pred_check_branch
        %222 = sbr.rel (%p220) target = $region16
      $region15: #{tpu_custom_call.1} parent=5 // pred_region
        // Predicated region
        $region17: #{tpu_custom_call.1} parent=15 // pred_check
          %p223 = pneg %p64
        $region18: #{tpu_custom_call.1} parent=15 // pred_check_branch
          %225 = sbr.rel (%p223) target = $region20
        $region19: #{tpu_custom_call.1} parent=15 // pred_region
          %s226 = sand.u32 %s54, 1
          %s227 = scalar_lea.sflag [#allocation3], %s226
          %s228 = sand.u32 %s54, 1
          %s229 = smul.addr %s228, 8
          %s230 = scalar_lea.vmem [#allocation2], %s229
          %s231 = sadd.s32 %s28, %s30
          %s232 = smul.u32 2, %s231
          %s234 = ssub.s32 128, 128
          %235 = vsyncadd %s227, %s234
          %s236 = smul.addr %s29, 2
          %s237 = sadd.s32 %s232, %s236
          %s238 = smul.addr %s237, 64
          %s239 = scalar_lea.hbm %s0, %s238
          %s241 = sshll.u32 %s230, 4
          %s242 = int_to_ptr.vmem [resolvable:$true] %s241
          %244 = dma.hbm_to_vmem [thread:$0]  %s239, 128, %s242, %s227
        $region20: #{tpu_custom_call.1} parent=15 // pred_fallthru
          _
        // Predicated region
        $region21: #{tpu_custom_call.1} parent=15 // pred_check
          %p245 = pneg %p94
        $region22: #{tpu_custom_call.1} parent=15 // pred_check_branch
          %247 = sbr.rel (%p245) target = $region24
        $region23: #{tpu_custom_call.1} parent=15 // pred_region
          %s248 = sand.u32 %s84, 1
          %s249 = scalar_lea.sflag [#allocation6], %s248
          %s250 = sand.u32 %s84, 1
          %s251 = smul.addr %s250, 2
          %s252 = scalar_lea.vmem [#allocation5], %s251
          %s253 = sadd.s32 %s28, %s30
          %s254 = smul.u32 2, %s253
          %s256 = ssub.s32 32, 32
          %257 = vsyncadd %s249, %s256
          %s258 = smul.addr %s29, 2
          %s259 = sadd.s32 %s254, %s258
          %s260 = smul.addr %s259, 16
          %s261 = scalar_lea.hbm %s1, %s260
          %s263 = sshll.u32 %s252, 4
          %s264 = int_to_ptr.vmem [resolvable:$true] %s263
          %266 = dma.hbm_to_vmem [thread:$0]  %s261, 32, %s264, %s249
        $region24: #{tpu_custom_call.1} parent=15 // pred_fallthru
          _
      $region16: #{tpu_custom_call.1} parent=5 // pred_fallthru
        _
      %p267 = scmp.le.s32.totalorder 1, %s21
      %p268 = scmp.lt.s32.totalorder %s21, 3
      %p269 = pnand %p267, %p268
      %p270 = pneg %p269
      // Predicated region
      $region25: #{tpu_custom_call.1} parent=5 // pred_check
        _
      $region26: #{tpu_custom_call.1} parent=5 // pred_check_branch
        %272 = sbr.rel (%p269) target = $region28
      $region27: #{tpu_custom_call.1} parent=5 // pred_region
        %s273 = ssub.s32 %s21, 1
        %s274 = sand.u32 %s57, 1
        %s275 = scalar_lea.sflag [#allocation3], %s274
        %s276 = sand.u32 %s57, 1
        %s277 = smul.addr %s276, 8
        %s278 = scalar_lea.vmem [#allocation2], %s277
        // Predicated region
        $region29: #{tpu_custom_call.1} parent=27 // pred_check
          %p279 = pneg %p70
        $region30: #{tpu_custom_call.1} parent=27 // pred_check_branch
          %281 = sbr.rel (%p279) target = $region32
        $region31: #{tpu_custom_call.1} parent=27 // pred_region
          %282 = dma.done %s275, 128
        $region32: #{tpu_custom_call.1} parent=27 // pred_fallthru
          _
        %s283 = sand.u32 %s87, 1
        %s284 = scalar_lea.sflag [#allocation6], %s283
        %s285 = sand.u32 %s87, 1
        %s286 = smul.addr %s285, 2
        %s287 = scalar_lea.vmem [#allocation5], %s286
        // Predicated region
        $region33: #{tpu_custom_call.1} parent=27 // pred_check
          %p288 = pneg %p100
        $region34: #{tpu_custom_call.1} parent=27 // pred_check_branch
          %290 = sbr.rel (%p288) target = $region36
        $region35: #{tpu_custom_call.1} parent=27 // pred_region
          %291 = dma.done %s284, 32
        $region36: #{tpu_custom_call.1} parent=27 // pred_fallthru
          _
        %s292 = sand.u32 %s57, 1
        %s293 = scalar_lea.sflag [#allocation3], %s292
        %s294 = sand.u32 %s57, 1
        %s295 = smul.addr %s294, 8
        %s296 = scalar_lea.vmem [#allocation2], %s295
        %p297 = pneg %p70
        %p298 = pneg %p67
        %s299 = sand.u32 %s87, 1
        %s300 = scalar_lea.sflag [#allocation6], %s299
        %s301 = sand.u32 %s87, 1
        %s302 = smul.addr %s301, 2
        %s303 = scalar_lea.vmem [#allocation5], %s302
        %p304 = pneg %p100
        %p305 = pneg %p97
        %p306 = pneg %p126
        %p307 = pneg %p123
        %p308 = pneg %p152
        %p309 = pneg %p149
        %p310 = pneg %p178
        %p311 = pneg %p175
        %p312 = pneg %p204
        %p313 = pneg %p201
        %s314 = sadd.s32 %s31, %s33
        %s315 = smul.u32 2, %s314
        %s316 = sadd.s32 %s31, %s33
        %s317 = smul.u32 2, %s316
        %p318 = scmp.eq.s32.totalorder %s32, 0
        %p319 = scmp.eq.s32.totalorder %s33, 0
        %p320 = pnand %p318, %p319
        %p321 = pneg %p320
        // Predicated region
        $region37: #{tpu_custom_call.1} parent=27 // pred_check
          _
        $region38: #{tpu_custom_call.1} parent=27 // pred_check_branch
          %323 = sbr.rel (%p320) target = $region40
        $region39: #{tpu_custom_call.1} parent=27 // pred_region
          %324 = vst [vmem:[#allocation7] sm:$0xf] 0.0
          %325 = vst [vmem:[#allocation8] sm:$0xf] 0.0
          %326 = vst [vmem:[#allocation10] sm:$0xf] 0.0
          %327 = vst [vmem:[#allocation11] sm:$0x1] 0.0
        $region40: #{tpu_custom_call.1} parent=27 // pred_fallthru
          _
        %s328 = sadd.s32 %s31, %s33
        %s329 = smul.u32 %s328, 256
        %v330 = vlaneseq
        %v331 = vshrl.u32 %v330, 7
        %v332 = vlaneseq
        %v333 = vand.u32 %v332, 127
        %v334 = vadd.s32 %v333, 128
        %v335 = vld [vmem:[%s278] sm:$0xff]
        %v336 = vld [vmem:[%s287] sm:$0x3]
        %v337 = vstv %s329
        %v338 = vadd.s32 %v337, %v333
        %v339 = vadd.s32 %v337, %v334
        %vm340 = vcmp.lt.s32.totalorder %v338, 256
        %vm341 = vcmp.lt.s32.totalorder %v339, 256
        %v342 = vlaneseq
        %v343 = vshrl.u32 %v342, 7
        %v344 = vsub.s32 0, %v343
        %v345 = vrot.slane %v336, %v344
        %v346 = vlaneseq
        %v347 = vshrl.u32 %v346, 7
        %v348 = vsub.s32 1, %v347
        %v349 = vrot.slane %v336, %v348
        %v350 = vsel %vm340, %v345, 4294967295
        %v351 = vsel %vm341, %v349, 4294967295
        %v353 = vcombine.high %v335, %v335
        %vm355 = vcmask 1043456
        %v356 = vsel %vm355, %v335, -inf
        %v357 = vrot.slane %v356, 4
        %v358 = vmax.f32 %v356, %v357
        %v359 = vrot.slane %v358, 2
        %v360 = vmax.f32 %v358, %v359
        %v361 = vrot.slane %v360, 1
        %v362 = vmax.f32 %v360, %v361
        %v363 = vsel %vm355, %v353, -inf
        %v364 = vrot.slane %v363, 4
        %v365 = vmax.f32 %v363, %v364
        %v366 = vrot.slane %v365, 2
        %v367 = vmax.f32 %v365, %v366
        %v368 = vrot.slane %v367, 1
        %v369 = vmax.f32 %v367, %v368
        %v372 = vcombine.low %v362, %v369
        %v374 = vsub.f32 %v335, %v372
        %v375 = vmul.f32 %v374, 1.442695
        %v376 = vpow.pop %v375
        %v378 = vcombine.high %v376, %v376
        %v380 = vsel %vm355, %v376, 0.0
        %v381 = vrot.slane %v380, 4
        %v382 = vadd.f32 %v380, %v381
        %v383 = vrot.slane %v382, 2
        %v384 = vadd.f32 %v382, %v383
        %v385 = vrot.slane %v384, 1
        %v386 = vadd.f32 %v384, %v385
        %v387 = vsel %vm355, %v378, 0.0
        %v388 = vrot.slane %v387, 4
        %v389 = vadd.f32 %v387, %v388
        %v390 = vrot.slane %v389, 2
        %v391 = vadd.f32 %v389, %v390
        %v392 = vrot.slane %v391, 1
        %v393 = vadd.f32 %v391, %v392
        %v394 = vrcp.pop %v386
        %v395 = vrcp.pop %v393
        %v398 = vcombine.low %v394, %v395
        %v400 = vmul.f32 %v376, %v398
        %v401 = vlaneseq
        %v402 = vshrl.u32 %v401, 7
        %v403 = vsub.s32 0, %v402
        %v404 = vrot.slane %v350, %v403
        %v405 = vlaneseq
        %v406 = vshrl.u32 %v405, 7
        %v407 = vsub.s32 0, %v406
        %v408 = vrot.slane %v351, %v407
        %vm409 = vcmp.eq.s32.totalorder %v404, %v331
        %vm410 = vcmp.eq.s32.totalorder %v408, %v331
        %v412 = vcombine.high %v400, %v400
        %v414 = vsel %vm409, %v400, 0.0
        %v415 = vsel %vm410, %v412, 0.0
        %v416 = vsel %vm340, 1, 0
        %v417 = vsel %vm341, 1, 0
        %vm418 = vcmp.eq.s32.totalorder %v416, 1
        %vm419 = vcmp.eq.s32.totalorder %v417, 1
        %v420 = vsel %vm418, %v400, 0.0
        %v421 = vsel %vm419, %v412, 0.0
        %v422 = vsel %vm355, %v414, 0.0
        %v423 = vrot.slane %v422, 4
        %v424 = vadd.f32 %v422, %v423
        %v425 = vrot.slane %v424, 2
        %v426 = vadd.f32 %v424, %v425
        %v427 = vrot.slane %v426, 1
        %v428 = vadd.f32 %v426, %v427
        %v429 = vsel %vm355, %v415, 0.0
        %v430 = vrot.slane %v429, 4
        %v431 = vadd.f32 %v429, %v430
        %v432 = vrot.slane %v431, 2
        %v433 = vadd.f32 %v431, %v432
        %v434 = vrot.slane %v433, 1
        %v435 = vadd.f32 %v433, %v434
        %v436 = vmax.f32 %v428, 1e-37
        %v437 = vmax.f32 %v435, 1e-37
        %v438 = vlog2.pop %v436
        %v439 = vmul.f32 %v438, 0.6931472
        %v440 = vlog2.pop %v437
        %v441 = vmul.f32 %v440, 0.6931472
        %v442 = vsub.f32 0.0, %v439
        %v443 = vsub.f32 0.0, %v441
        %vm444 = vcmp.ne.s32.totalorder %v336, 255
        %v445 = vsel %vm444, 1, 0
        %v446 = vlaneseq
        %v447 = vshrl.u32 %v446, 7
        %v448 = vsub.s32 0, %v447
        %v449 = vrot.slane %v445, %v448
        %v450 = vlaneseq
        %v451 = vshrl.u32 %v450, 7
        %v452 = vsub.s32 1, %v451
        %v453 = vrot.slane %v445, %v452
        %vm454 = vcmp.ne.s32.totalorder %v449, 0
        %vm455 = vcmp.ne.s32.totalorder %v453, 0
        %vm456 = vmand %vm340, %vm454
        %vm457 = vmand %vm341, %vm455
        %v458 = vsel %vm456, %v442, 0.0
        %v459 = vsel %vm457, %v443, 0.0
        %v460 = vadd.f32 %v414, %v415
        %v461 = vadd.f32 %v420, %v421
        %v462 = vsel %vm409, 1, 0
        %v463 = vsel %vm410, 1, 0
        %v464 = vcvt.s32.f32 %v462
        %v465 = vcvt.s32.f32 %v463
        %v466 = vadd.f32 %v464, %v465
        %v467 = vadd.f32 %v458, %v459
        %v468 = vld [vmem:[#allocation7] sm:$0xf]
        %v469 = vadd.f32 %v468, %v460
        %470 = vst [vmem:[#allocation7] sm:$0xf] %v469
        %v471 = vld [vmem:[#allocation8] sm:$0xf]
        %v472 = vadd.f32 %v471, %v461
        %473 = vst [vmem:[#allocation8] sm:$0xf] %v472
        %v474 = vld [vmem:[#allocation10] sm:$0xf]
        %v475 = vadd.f32 %v474, %v466
        %476 = vst [vmem:[#allocation10] sm:$0xf] %v475
        %v477 = vld [vmem:[#allocation11] sm:$0x1]
        %v478 = vadd.f32 %v477, %v467
        %479 = vst [vmem:[#allocation11] sm:$0x1] %v478
        // Predicated region
        $region41: #{tpu_custom_call.1} parent=27 // pred_check
          %p480 = pneg %p123
        $region42: #{tpu_custom_call.1} parent=27 // pred_check_branch
          %482 = sbr.rel (%p480) target = $region44
        $region43: #{tpu_custom_call.1} parent=27 // pred_region
          %s484 = ssub.s32 64, 64
          %485 = vsyncadd [#allocation4], %s484
          %s486 = smul.addr %s31, 64
          %s487 = scalar_lea.hbm %s2, %s486
          %s489 = sshll.u32 [#allocation7], 4
          %s490 = int_to_ptr.vmem [resolvable:$true] %s489
          %492 = dma.vmem_to_hbm [thread:$0]  %s490, 64, %s487, [#allocation4]
        $region44: #{tpu_custom_call.1} parent=27 // pred_fallthru
          _
        // Predicated region
        $region45: #{tpu_custom_call.1} parent=27 // pred_check
          %p493 = pneg %p149
        $region46: #{tpu_custom_call.1} parent=27 // pred_check_branch
          %495 = sbr.rel (%p493) target = $region48
        $region47: #{tpu_custom_call.1} parent=27 // pred_region
          %s497 = ssub.s32 64, 64
          %498 = vsyncadd [#allocation9], %s497
          %s499 = smul.addr %s31, 64
          %s500 = scalar_lea.hbm %s3, %s499
          %s502 = sshll.u32 [#allocation8], 4
          %s503 = int_to_ptr.vmem [resolvable:$true] %s502
          %505 = dma.vmem_to_hbm [thread:$0]  %s503, 64, %s500, [#allocation9]
        $region48: #{tpu_custom_call.1} parent=27 // pred_fallthru
          _
        // Predicated region
        $region49: #{tpu_custom_call.1} parent=27 // pred_check
          %p506 = pneg %p175
        $region50: #{tpu_custom_call.1} parent=27 // pred_check_branch
          %508 = sbr.rel (%p506) target = $region52
        $region51: #{tpu_custom_call.1} parent=27 // pred_region
          %s510 = ssub.s32 64, 64
          %511 = vsyncadd [#allocation9], %s510
          %s512 = smul.addr %s31, 64
          %s513 = scalar_lea.hbm %s4, %s512
          %s515 = sshll.u32 [#allocation10], 4
          %s516 = int_to_ptr.vmem [resolvable:$true] %s515
          %518 = dma.vmem_to_hbm [thread:$0]  %s516, 64, %s513, [#allocation9]
        $region52: #{tpu_custom_call.1} parent=27 // pred_fallthru
          _
        // Predicated region
        $region53: #{tpu_custom_call.1} parent=27 // pred_check
          %p519 = pneg %p201
        $region54: #{tpu_custom_call.1} parent=27 // pred_check_branch
          %521 = sbr.rel (%p519) target = $region56
        $region55: #{tpu_custom_call.1} parent=27 // pred_region
          %s523 = ssub.s32 16, 16
          %524 = vsyncadd [#allocation12], %s523
          %s525 = smul.addr %s31, 16
          %s526 = scalar_lea.hbm %s5, %s525
          %s528 = sshll.u32 [#allocation11], 4
          %s529 = int_to_ptr.vmem [resolvable:$true] %s528
          %531 = dma.vmem_to_hbm [thread:$0]  %s529, 16, %s526, [#allocation12]
        $region56: #{tpu_custom_call.1} parent=27 // pred_fallthru
          _
        // Predicated region
        $region57: #{tpu_custom_call.1} parent=27 // pred_check
          %p532 = pneg %p123
        $region58: #{tpu_custom_call.1} parent=27 // pred_check_branch
          %534 = sbr.rel (%p532) target = $region60
        $region59: #{tpu_custom_call.1} parent=27 // pred_region
          %535 = dma.done [#allocation4], 64
        $region60: #{tpu_custom_call.1} parent=27 // pred_fallthru
          _
        // Predicated region
        $region61: #{tpu_custom_call.1} parent=27 // pred_check
          %p536 = pneg %p149
        $region62: #{tpu_custom_call.1} parent=27 // pred_check_branch
          %538 = sbr.rel (%p536) target = $region64
        $region63: #{tpu_custom_call.1} parent=27 // pred_region
          %539 = dma.done [#allocation9], 64
        $region64: #{tpu_custom_call.1} parent=27 // pred_fallthru
          _
        // Predicated region
        $region65: #{tpu_custom_call.1} parent=27 // pred_check
          %p540 = pneg %p175
        $region66: #{tpu_custom_call.1} parent=27 // pred_check_branch
          %542 = sbr.rel (%p540) target = $region68
        $region67: #{tpu_custom_call.1} parent=27 // pred_region
          %543 = dma.done [#allocation9], 64
        $region68: #{tpu_custom_call.1} parent=27 // pred_fallthru
          _
        // Predicated region
        $region69: #{tpu_custom_call.1} parent=27 // pred_check
          %p544 = pneg %p201
        $region70: #{tpu_custom_call.1} parent=27 // pred_check_branch
          %546 = sbr.rel (%p544) target = $region72
        $region71: #{tpu_custom_call.1} parent=27 // pred_region
          %547 = dma.done [#allocation12], 16
        $region72: #{tpu_custom_call.1} parent=27 // pred_fallthru
          _
      $region28: #{tpu_custom_call.1} parent=5 // pred_fallthru
        _
      %p548 = scmp.le.s32.totalorder 2, %s21
      // Predicated region
      $region73: #{tpu_custom_call.1} parent=5 // pred_check
        %p549 = pneg %p548
      $region74: #{tpu_custom_call.1} parent=5 // pred_check_branch
        %551 = sbr.rel (%p549) target = $region76
      $region75: #{tpu_custom_call.1} parent=5 // pred_region
        %s552 = ssub.s32 %s21, 2
      $region76: #{tpu_custom_call.1} parent=5 // pred_fallthru
        _
    $region6: #{tpu_custom_call.1} parent=1 // loop_footer
      %s25 = sadd.s32 1, %s21
    $region7: #{tpu_custom_call.1} parent=1 // loop_footer_branch
      %20 = sbr.rel target = $region3
    $region8: #{tpu_custom_call.1} parent=1 // loop_exit
      _
    %553 = vsyncpa [#allocation3], 1
    %s554 = scalar_lea.sflag [#allocation3], 1
    %555 = vsyncpa %s554, 1
    %556 = vsyncpa [#allocation6], 1
    %s557 = scalar_lea.sflag [#allocation6], 1
    %558 = vsyncpa %s557, 1
    %559 = vsyncpa [#allocation4], 1
    %s560 = scalar_lea.sflag [#allocation4], 1
    %561 = vsyncpa %s560, 1
    %562 = vsyncpa [#allocation9], 1
    %563 = vsyncpa [#allocation12], 1

</llo_original>
